<compile_context>
chip_gen: v5e
topology: v5e:2x2
jax: 0.10.0
libtpu: 0.0.40
codegen_flags: <defaults>
</compile_context>

<pallas_src>
import math

import jax
import jax.numpy as jnp
import jax.scipy.linalg
from jax.experimental import pallas as pl
from jax.experimental.pallas import tpu as pltpu


# ---------------------------------------------------------------------------
# Fused kernel: both GraphConvolution layers, both branches, concat, softmax
# ---------------------------------------------------------------------------
def gcn_fused_kernel(xy_ref, adj_ref, w1_ref, b1_ref, w2_ref, b2_ref, o_ref):
    adj = adj_ref[...]                                                  # [N, N]

    # ----- layer 1 (both branches fused via block-diagonal W1) --------------
    s = jnp.dot(xy_ref[...], w1_ref[...],
                preferred_element_type=jnp.float32)                     # [N, 2*NHID]
    h = jnp.dot(adj, s, preferred_element_type=jnp.float32) + b1_ref[...]
    h = jnp.maximum(h, 0.0)                                             # ReLU
    # TODO(synk): F.dropout(p=0.6) is stochastic; eval-mode (identity) here.

    # ----- layer 2 (both branches fused via block-diagonal W2) --------------
    p = jnp.dot(h, w2_ref[...],
                preferred_element_type=jnp.float32)                     # [N, 2*NCLASS]
    z = jnp.dot(adj, p, preferred_element_type=jnp.float32) + b2_ref[...]
    # z already IS concat([out_x, out_y], axis=1)

    # ----- row-wise log_softmax over the concatenated class dim -------------
    m = jnp.max(z, axis=1, keepdims=True)
    zs = z - m
    lse = jnp.log(jnp.sum(jnp.exp(zs), axis=1, keepdims=True))
    o_ref[...] = (zs - lse).astype(o_ref.dtype)


# ---------------------------------------------------------------------------
# Wrapper: single pallas_call, whole problem in one VMEM block
# ---------------------------------------------------------------------------
@jax.jit
def gcn_forward(x, y, adj, w1, b1, w2, b2):
    n = x.shape[0]
    nclass = w2.shape[1]

    # Pre-pack inputs / weights / biases (free XLA layout ops, outside kernel)
    xy = jnp.concatenate([x, y], axis=1)                      # [N, 2*NFEAT]
    w1_blk = jax.scipy.linalg.block_diag(w1, w1)              # [2*NFEAT, 2*NHID]
    w2_blk = jax.scipy.linalg.block_diag(w2, w2)              # [2*NHID, 2*NCLASS]
    b1c = jnp.concatenate([b1, b1], axis=1)                   # [1, 2*NHID]
    b2c = jnp.concatenate([b2, b2], axis=1)                   # [1, 2*NCLASS]

    vmem = pl.BlockSpec(memory_space=pltpu.MemorySpace.VMEM)
    return pl.pallas_call(
        gcn_fused_kernel,
        out_shape=jax.ShapeDtypeStruct((n, 2 * nclass), jnp.float32),
        in_specs=[vmem] * 6,
        out_specs=vmem,
        compiler_params=pltpu.CompilerParams(vmem_limit_bytes=32 * 1024 * 1024),
    )(xy, adj, w1_blk, b1c, w2_blk, b2c)


# ---------------------------------------------------------------------------
# Pure-JAX reference (mirrors the PyTorch module, eval-mode dropout)
# ---------------------------------------------------------------------------
def gcn_forward_ref(x, y, adj, w1, b1, w2, b2):
    hx = jnp.maximum(adj @ (x @ w1) + b1, 0.0)
    ox = adj @ (hx @ w2) + b2
    hy = jnp.maximum(adj @ (y @ w1) + b1, 0.0)
    oy = adj @ (hy @ w2) + b2
    z = jnp.concatenate([ox, oy], axis=1)
    return jax.nn.log_softmax(z, axis=1)


# ---------------------------------------------------------------------------
# Parameter init (deterministic, matching GraphConvolution.reset_parameters)
# ---------------------------------------------------------------------------
def init_gc_params(key, in_features, out_features):
    stdv = 1.0 / math.sqrt(out_features)
    kw, kb = jax.random.split(key)
    w = jax.random.uniform(kw, (in_features, out_features), jnp.float32, -stdv, stdv)
    b = jax.random.uniform(kb, (1, out_features), jnp.float32, -stdv, stdv)
    return w, b


if __name__ == "__main__":
    # small shapes consistent with the forward: N nodes, nfeat -> nhid -> nclass
    N, NFEAT, NHID, NCLASS = 16, 32, 16, 8

    key = jax.random.PRNGKey(0)
    kx, ky, kadj, k1, k2 = jax.random.split(key, 5)

    x = jax.random.normal(kx, (N, NFEAT), jnp.float32)
    y = jax.random.normal(ky, (N, NFEAT), jnp.float32)

    # symmetric row-normalized adjacency with self loops (typical GCN adj)
    a = (jax.random.uniform(kadj, (N, N)) > 0.7).astype(jnp.float32)
    a = jnp.maximum(a, a.T) + jnp.eye(N, dtype=jnp.float32)
    adj = a / jnp.sum(a, axis=1, keepdims=True)

    w1, b1 = init_gc_params(k1, NFEAT, NHID)
    w2, b2 = init_gc_params(k2, NHID, NCLASS)

    out = gcn_forward(x, y, adj, w1, b1, w2, b2)
    jax.block_until_ready(out)

    assert out.shape == (N, 2 * NCLASS)
    # rows of log_softmax should exp-sum to 1
    assert bool(jnp.all(jnp.abs(jnp.sum(jnp.exp(out), axis=1) - 1.0) < 1e-4))
    # match the pure-JAX reference of the PyTorch module
    ref = gcn_forward_ref(x, y, adj, w1, b1, w2, b2)
    assert bool(jnp.all(jnp.abs(out - ref) < 1e-4))
    print("KERNEL_OK")
</pallas_src>

<mosaic_0001>
module attributes {stable_mosaic.version = 11 : i64} {
  func.func @gcn_fused_kernel(%arg0: memref<16x64xf32, #tpu.memory_space<vmem>>, %arg1: memref<16x16xf32, #tpu.memory_space<vmem>>, %arg2: memref<64x32xf32, #tpu.memory_space<vmem>>, %arg3: memref<1x32xf32, #tpu.memory_space<vmem>>, %arg4: memref<32x16xf32, #tpu.memory_space<vmem>>, %arg5: memref<1x16xf32, #tpu.memory_space<vmem>>, %arg6: memref<16x16xf32, #tpu.memory_space<vmem>>) attributes {dimension_semantics = [], scalar_prefetch = 0 : i64, scratch_operands = 0 : i64, tpu.core_type = #tpu.core_type<tc>} {
    %c0 = arith.constant 0 : index
    %c0_0 = arith.constant 0 : index
    %0 = vector.load %arg1[%c0, %c0_0] : memref<16x16xf32, #tpu.memory_space<vmem>>, vector<16x16xf32>
    %c0_1 = arith.constant 0 : index
    %c0_2 = arith.constant 0 : index
    %1 = vector.load %arg0[%c0_1, %c0_2] : memref<16x64xf32, #tpu.memory_space<vmem>>, vector<16x64xf32>
    %c0_3 = arith.constant 0 : index
    %c0_4 = arith.constant 0 : index
    %2 = vector.load %arg2[%c0_3, %c0_4] : memref<64x32xf32, #tpu.memory_space<vmem>>, vector<64x32xf32>
    %cst = arith.constant dense<0.000000e+00> : vector<16x32xf32>
    %3 = tpu.matmul %1, %2, %cst {dimension_numbers = #tpu.dot_dimension_numbers<[1], [0], [0], [1], [0, 0, 1, 1], [], []>} : vector<16x64xf32>, vector<64x32xf32>, vector<16x32xf32> -> vector<16x32xf32>
    %cst_5 = arith.constant dense<0.000000e+00> : vector<16x32xf32>
    %4 = tpu.matmul %0, %3, %cst_5 {dimension_numbers = #tpu.dot_dimension_numbers<[1], [0], [0], [1], [0, 0, 1, 1], [], []>} : vector<16x16xf32>, vector<16x32xf32>, vector<16x32xf32> -> vector<16x32xf32>
    %c0_6 = arith.constant 0 : index
    %c0_7 = arith.constant 0 : index
    %5 = vector.load %arg3[%c0_6, %c0_7] : memref<1x32xf32, #tpu.memory_space<vmem>>, vector<1x32xf32>
    %6 = vector.broadcast %5 : vector<1x32xf32> to vector<16x32xf32>
    %7 = arith.addf %4, %6 : vector<16x32xf32>
    %cst_8 = arith.constant 0.000000e+00 : f32
    %8 = vector.broadcast %cst_8 : f32 to vector<16x32xf32>
    %9 = arith.maximumf %7, %8 : vector<16x32xf32>
    %c0_9 = arith.constant 0 : index
    %c0_10 = arith.constant 0 : index
    %10 = vector.load %arg4[%c0_9, %c0_10] : memref<32x16xf32, #tpu.memory_space<vmem>>, vector<32x16xf32>
    %cst_11 = arith.constant dense<0.000000e+00> : vector<16x16xf32>
    %11 = tpu.matmul %9, %10, %cst_11 {dimension_numbers = #tpu.dot_dimension_numbers<[1], [0], [0], [1], [0, 0, 1, 1], [], []>} : vector<16x32xf32>, vector<32x16xf32>, vector<16x16xf32> -> vector<16x16xf32>
    %cst_12 = arith.constant dense<0.000000e+00> : vector<16x16xf32>
    %12 = tpu.matmul %0, %11, %cst_12 {dimension_numbers = #tpu.dot_dimension_numbers<[1], [0], [0], [1], [0, 0, 1, 1], [], []>} : vector<16x16xf32>, vector<16x16xf32>, vector<16x16xf32> -> vector<16x16xf32>
    %c0_13 = arith.constant 0 : index
    %c0_14 = arith.constant 0 : index
    %13 = vector.load %arg5[%c0_13, %c0_14] : memref<1x16xf32, #tpu.memory_space<vmem>>, vector<1x16xf32>
    %14 = vector.broadcast %13 : vector<1x16xf32> to vector<16x16xf32>
    %15 = arith.addf %12, %14 : vector<16x16xf32>
    %cst_15 = arith.constant dense<0xFF800000> : vector<16xf32>
    %16 = vector.multi_reduction <maximumf>, %15, %cst_15 [1] : vector<16x16xf32> to vector<16xf32>
    %17 = vector.shape_cast %16 : vector<16xf32> to vector<16x1xf32>
    %18 = vector.broadcast %17 : vector<16x1xf32> to vector<16x16xf32>
    %19 = arith.subf %15, %18 : vector<16x16xf32>
    %20 = math.exp %19 : vector<16x16xf32>
    %cst_16 = arith.constant dense<0.000000e+00> : vector<16xf32>
    %21 = vector.multi_reduction <add>, %20, %cst_16 [1] : vector<16x16xf32> to vector<16xf32>
    %22 = vector.shape_cast %21 : vector<16xf32> to vector<16x1xf32>
    %23 = math.log %22 : vector<16x1xf32>
    %24 = vector.broadcast %23 : vector<16x1xf32> to vector<16x16xf32>
    %25 = arith.subf %19, %24 : vector<16x16xf32>
    %c0_17 = arith.constant 0 : index
    %c0_18 = arith.constant 0 : index
    %26 = vector.load %arg6[%c0_17, %c0_18] : memref<16x16xf32, #tpu.memory_space<vmem>>, vector<16x16xf32>
    tpu.vector_store %arg6[%c0_17, %c0_18], %25 {strides = array<i32>} : memref<16x16xf32, #tpu.memory_space<vmem>>, vector<16x16xf32>,
    return
  }
}

</mosaic_0001>

<llo_original>
// kernel: gcn_forward.1
$region0: #{gcn_forward.1}
  #allocation0 [shape = 'u32[]', space=smem, size = 0x4, offset = 0x4, fixed_abs, tag = 'smem constant byte address 0x4 - core index']
  #allocation1 [shape = 'u32[72,128]{1,0:T(1,128)}', space=vmem, size = 0x9000, scoped, tag = 'internal scratch']
  %s0 = inlined_call_operand.vmem [shape: f32[16,64], index: 0, kind: input, shape index: {}]
  %s1 = inlined_call_operand.vmem [shape: f32[16,16], index: 1, kind: input, shape index: {}]
  %s2 = inlined_call_operand.vmem [shape: f32[64,32], index: 2, kind: input, shape index: {}]
  %s3 = inlined_call_operand.vmem [shape: f32[1,32], index: 3, kind: input, shape index: {}]
  %s4 = inlined_call_operand.vmem [shape: f32[32,16], index: 4, kind: input, shape index: {}]
  %s5 = inlined_call_operand.vmem [shape: f32[1,16], index: 5, kind: input, shape index: {}]
  %s6 = inlined_call_operand.hbm [shape: f32[16,16], index: 6, kind: output, shape index: {}]
  %s7 = sld [smem:[#allocation0]]
  $region34: #{gcn_forward.1} parent=0
    _
  %s9 = ssub.s32 1, %s7
  %s10 = scalar_select 0, %s9, %s7
  $region1: #{gcn_forward.1} parent=0
    #allocation2 [shape = 'u8[8192]{0}', space=vmem, size = 0x2000, scoped, tag = 'output window, operand 0, single buffered']
    #allocation3 [shape = 's32[1]{0}', space=sflag, size = 0x4, scoped, tag = 'scoped memory for gcn_forward.1']
    %11 = vsyncpa [#allocation3], 0
    // Predicated region
    $region2: #{gcn_forward.1} parent=1 // pred_check
      _
    $region3: #{gcn_forward.1} parent=1 // pred_check_branch
      %13 = sbr.rel (0) target = $region5
    $region4: #{gcn_forward.1} parent=1 // pred_region
      _
    $region5: #{gcn_forward.1} parent=1 // pred_fallthru
      _
    // Predicated region
    $region6: #{gcn_forward.1} parent=1 // pred_check
      _
    $region7: #{gcn_forward.1} parent=1 // pred_check_branch
      %15 = sbr.rel (0) target = $region9
    $region8: #{gcn_forward.1} parent=1 // pred_region
      _
    $region9: #{gcn_forward.1} parent=1 // pred_fallthru
      _
    // Predicated region
    $region10: #{gcn_forward.1} parent=1 // pred_check
      _
    $region11: #{gcn_forward.1} parent=1 // pred_check_branch
      %17 = sbr.rel (0) target = $region13
    $region12: #{gcn_forward.1} parent=1 // pred_region
      _
    $region13: #{gcn_forward.1} parent=1 // pred_fallthru
      _
    // Predicated region
    $region14: #{gcn_forward.1} parent=1 // pred_check
      _
    $region15: #{gcn_forward.1} parent=1 // pred_check_branch
      %19 = sbr.rel (0) target = $region17
    $region16: #{gcn_forward.1} parent=1 // pred_region
      _
    $region17: #{gcn_forward.1} parent=1 // pred_fallthru
      _
    // Predicated region
    $region18: #{gcn_forward.1} parent=1 // pred_check
      _
    $region19: #{gcn_forward.1} parent=1 // pred_check_branch
      %21 = sbr.rel (0) target = $region21
    $region20: #{gcn_forward.1} parent=1 // pred_region
      _
    $region21: #{gcn_forward.1} parent=1 // pred_fallthru
      _
    // Predicated region
    $region22: #{gcn_forward.1} parent=1 // pred_check
      _
    $region23: #{gcn_forward.1} parent=1 // pred_check_branch
      %23 = sbr.rel (0) target = $region25
    $region24: #{gcn_forward.1} parent=1 // pred_region
      _
    $region25: #{gcn_forward.1} parent=1 // pred_fallthru
      _
    %v24 = vld [vmem:[%s1] sm:$0xff]
    %v25 = vld [vmem:[%s1 + $0x8] sm:$0xff]
    %v26 = vld [vmem:[%s0] sm:$0xff]
    %v27 = vld [vmem:[%s0 + $0x8] sm:$0xff]
    %v28 = vld [vmem:[%s2] sm:$0xff]
    %v29 = vld [vmem:[%s2 + $0x8] sm:$0xff]
    %v30 = vld [vmem:[%s2 + $0x10] sm:$0xff]
    %v31 = vld [vmem:[%s2 + $0x18] sm:$0xff]
    %v32 = vld [vmem:[%s2 + $0x20] sm:$0xff]
    %v33 = vld [vmem:[%s2 + $0x28] sm:$0xff]
    %v34 = vld [vmem:[%s2 + $0x30] sm:$0xff]
    %v35 = vld [vmem:[%s2 + $0x38] sm:$0xff]
    %vm36 = vcmask 523264
    %v38 = vsel %vm36, %v26, 0
    %v41 = vsel %vm36, %v27, 0
    %43 = vmatpush.msra.mxu0 0.0
    %44 = vmatpush.msra.mxu0 0.0
    %45 = vmatpush.msra.mxu0 0.0
    %46 = vmatpush.msra.mxu0 0.0
    %47 = vmatpush.msra.mxu0 0.0
    %48 = vmatpush.msra.mxu0 0.0
    %49 = vmatpush.msra.mxu0 0.0
    %50 = vmatpush.msra.mxu0 0.0
    %51 = vmatpush.msra.mxu0 %v35
    %52 = vmatpush.msra.mxu0 %v34
    %53 = vmatpush.msra.mxu0 %v33
    %54 = vmatpush.msra.mxu0 %v32
    %55 = vmatpush.msra.mxu0 %v31
    %56 = vmatpush.msra.mxu0 %v30
    %57 = vmatpush.msra.mxu0 %v29
    %58 = vmatpush.msra.mxu0 %v28
    %59 = vmatmul.f32.gmra.mxu0 %v38
    %v60 = vpop.f32.mrf.mxu0
    %v61 = vadd.f32 0.0, %v60
    %62 = vmatmul.f32.gmra.mxu0 %v41
    %v63 = vpop.f32.mrf.mxu0
    %v64 = vadd.f32 0.0, %v63
    %65 = vdwg.mxu0
    %v66 = vld [vmem:[%s3] sm:$0x1]
    %v68 = vperm.slane %v66, 0
    %vm70 = vcmask 130048
    %v72 = vsel %vm70, %v24, 0
    %v75 = vsel %vm70, %v25, 0
    %77 = vmatpush.msra.mxu0 0.0
    %78 = vmatpush.msra.mxu0 0.0
    %79 = vmatpush.msra.mxu0 0.0
    %80 = vmatpush.msra.mxu0 0.0
    %81 = vmatpush.msra.mxu0 0.0
    %82 = vmatpush.msra.mxu0 0.0
    %83 = vmatpush.msra.mxu0 0.0
    %84 = vmatpush.msra.mxu0 0.0
    %85 = vmatpush.msra.mxu0 0.0
    %86 = vmatpush.msra.mxu0 0.0
    %87 = vmatpush.msra.mxu0 0.0
    %88 = vmatpush.msra.mxu0 0.0
    %89 = vmatpush.msra.mxu0 0.0
    %90 = vmatpush.msra.mxu0 0.0
    %91 = vmatpush.msra.mxu0 %v64
    %92 = vmatpush.msra.mxu0 %v61
    %93 = vmatmul.f32.gmra.mxu0 %v72
    %v94 = vpop.f32.mrf.mxu0
    %v95 = vadd.f32 %v68, %v94
    %96 = vmatmul.f32.gmra.mxu0 %v75
    %v97 = vpop.f32.mrf.mxu0
    %v98 = vadd.f32 %v68, %v97
    %99 = vdwg.mxu0
    %v100 = vmax.f32 %v95, 0.0
    %v101 = vmax.f32 %v98, 0.0
    %v102 = vld [vmem:[%s4] sm:$0xff]
    %v103 = vld [vmem:[%s4 + $0x8] sm:$0xff]
    %v104 = vld [vmem:[%s4 + $0x10] sm:$0xff]
    %v105 = vld [vmem:[%s4 + $0x18] sm:$0xff]
    %vm106 = vcmask 261120
    %v108 = vsel %vm106, %v100, 0
    %v111 = vsel %vm106, %v101, 0
    %113 = vmatpush.msra.mxu0 0.0
    %114 = vmatpush.msra.mxu0 0.0
    %115 = vmatpush.msra.mxu0 0.0
    %116 = vmatpush.msra.mxu0 0.0
    %117 = vmatpush.msra.mxu0 0.0
    %118 = vmatpush.msra.mxu0 0.0
    %119 = vmatpush.msra.mxu0 0.0
    %120 = vmatpush.msra.mxu0 0.0
    %121 = vmatpush.msra.mxu0 0.0
    %122 = vmatpush.msra.mxu0 0.0
    %123 = vmatpush.msra.mxu0 0.0
    %124 = vmatpush.msra.mxu0 0.0
    %125 = vmatpush.msra.mxu0 %v105
    %126 = vmatpush.msra.mxu0 %v104
    %127 = vmatpush.msra.mxu0 %v103
    %128 = vmatpush.msra.mxu0 %v102
    %129 = vmatmul.f32.gmra.mxu0 %v108
    %v130 = vpop.f32.mrf.mxu0
    %v131 = vadd.f32 0.0, %v130
    %132 = vmatmul.f32.gmra.mxu0 %v111
    %v133 = vpop.f32.mrf.mxu0
    %v134 = vadd.f32 0.0, %v133
    %135 = vdwg.mxu0
    %v136 = vld [vmem:[%s5] sm:$0x1]
    %v138 = vperm.slane %v136, 0
    %140 = vmatpush.msra.mxu0 0.0
    %141 = vmatpush.msra.mxu0 0.0
    %142 = vmatpush.msra.mxu0 0.0
    %143 = vmatpush.msra.mxu0 0.0
    %144 = vmatpush.msra.mxu0 0.0
    %145 = vmatpush.msra.mxu0 0.0
    %146 = vmatpush.msra.mxu0 0.0
    %147 = vmatpush.msra.mxu0 0.0
    %148 = vmatpush.msra.mxu0 0.0
    %149 = vmatpush.msra.mxu0 0.0
    %150 = vmatpush.msra.mxu0 0.0
    %151 = vmatpush.msra.mxu0 0.0
    %152 = vmatpush.msra.mxu0 0.0
    %153 = vmatpush.msra.mxu0 0.0
    %154 = vmatpush.msra.mxu0 %v134
    %155 = vmatpush.msra.mxu0 %v131
    %156 = vmatmul.f32.gmra.mxu0 %v72
    %v157 = vpop.f32.mrf.mxu0
    %v158 = vadd.f32 %v138, %v157
    %159 = vmatmul.f32.gmra.mxu0 %v75
    %v160 = vpop.f32.mrf.mxu0
    %v161 = vadd.f32 %v138, %v160
    %162 = vdwg.mxu0
    %v163 = vsel %vm70, %v158, -inf
    %164 = vmax.xlane.f32.xlu0 %v163
    %v165 = vpop.xlane.xlu0 %164
    %v166 = vsel %vm70, %v161, -inf
    %167 = vmax.xlane.f32.xlu0 %v166
    %v168 = vpop.xlane.xlu0 %167
    %v169 = vsub.f32 %v158, %v165
    %v170 = vsub.f32 %v161, %v168
    %v171 = vmul.f32 %v169, 1.442695
    %v172 = vpow.pop %v171
    %v173 = vmul.f32 %v170, 1.442695
    %v174 = vpow.pop %v173
    %v175 = vsel %vm70, %v172, 0.0
    %176 = vadd.xlane.f32.xlu0 %v175
    %v177 = vpop.xlane.xlu0 %176
    %v178 = vsel %vm70, %v174, 0.0
    %179 = vadd.xlane.f32.xlu0 %v178
    %v180 = vpop.xlane.xlu0 %179
    %v181 = vlog2.pop %v177
    %v182 = vmul.f32 %v181, 0.6931472
    %v183 = vlog2.pop %v180
    %v184 = vmul.f32 %v183, 0.6931472
    %v185 = vsub.f32 %v169, %v182
    %v186 = vsub.f32 %v170, %v184
    %187 = vst.msk [vmem:[#allocation2] sm:$0xff] %vm70, %v185
    %188 = vst.msk [vmem:[#allocation2 + $0x8] sm:$0xff] %vm70, %v186
    // Predicated region
    $region26: #{gcn_forward.1} parent=1 // pred_check
      _
    $region27: #{gcn_forward.1} parent=1 // pred_check_branch
      %190 = sbr.rel (0) target = $region29
    $region28: #{gcn_forward.1} parent=1 // pred_region
      %192 = vsyncadd [#allocation3], 0
      %s193 = sshll.u32 [#allocation2], 4
      %s194 = int_to_ptr.vmem [resolvable:$true] %s193
      %s195 = sshll.u32 %s6, 4
      %s196 = int_to_ptr.hbm [resolvable:$true] %s195
      %201 = dma.vmem_to_hbm [thread:$0]  %s194, 256, %s196, [#allocation3], 128, 128, 8
    $region29: #{gcn_forward.1} parent=1 // pred_fallthru
      _
    // Predicated region
    $region30: #{gcn_forward.1} parent=1 // pred_check
      _
    $region31: #{gcn_forward.1} parent=1 // pred_check_branch
      %203 = sbr.rel (0) target = $region33
    $region32: #{gcn_forward.1} parent=1 // pred_region
      %205 = dma.done [#allocation3], 256
    $region33: #{gcn_forward.1} parent=1 // pred_fallthru
      _
    %206 = vsyncpa [#allocation3], 1

</llo_original>
